<compile_context>
chip_gen: v7x
topology: tpu7x:2x2x1
jax: 0.10.0
libtpu: 0.0.40
codegen_flags: <defaults>
</compile_context>

<pallas_src>
import jax
import jax.numpy as jnp
from jax.experimental import pallas as pl
from jax.experimental.pallas import tpu as pltpu


def _make_kernel(C, C4, T, V, TN):
    TV = T * V

    def kernel(x_ref, pool_ref, w1t_ref, b1_ref, w2t_ref, b2_ref, o_ref):
        # x_ref : (TN, C, T*V)   pool_ref: (T*V, T)
        # w1t   : (C, C4)  b1: (1, C4)   w2t: (C4, C)  b2: (1, C)
        # o_ref : (TN*T, C)
        x2 = x_ref[...].astype(jnp.float32).reshape(TN * C, TV)

        # torch.mean(x, dim=3) as one wide MXU matmul (pooling matrix = 1/V).
        pooled = jnp.dot(x2, pool_ref[...],
                         preferred_element_type=jnp.float32)          # (TN*C, T)

        # Rearrange the (small) pooled tensor so both 1x1 convs are single
        # wide matmuls over all TN samples.
        p2 = jnp.transpose(pooled.reshape(TN, C, T), (0, 2, 1)).reshape(TN * T, C)

        # Conv1d(C -> C//4, kernel=1)
        h = jnp.dot(p2, w1t_ref[...],
                    preferred_element_type=jnp.float32) + b1_ref[...]  # (TN*T, C4)

        # InstanceNorm1d(C//4): per-(sample, channel) normalize over T,
        # biased variance, eps=1e-5, no affine (PyTorch defaults).
        h3 = h.reshape(TN, T, C4)
        mu = jnp.mean(h3, axis=1, keepdims=True)
        var = jnp.mean((h3 - mu) * (h3 - mu), axis=1, keepdims=True)
        h3 = (h3 - mu) * jax.lax.rsqrt(var + 1e-5)
        h3 = jnp.maximum(h3, 0.0)                                      # ReLU

        # Conv1d(C//4 -> C, kernel=1)
        att = jnp.dot(h3.reshape(TN * T, C4), w2t_ref[...],
                      preferred_element_type=jnp.float32) + b2_ref[...]  # (TN*T, C)

        # Sigmoid; dropout is identity in eval mode.
        att = jax.nn.sigmoid(att)

        o_ref[...] = att.astype(o_ref.dtype)

    return kernel


def _pick_tn(n, bytes_per_sample):
    """Samples per grid step: ~1 MiB of input per block, >= 2 grid steps if possible."""
    target = 1 << 20
    tn = max(1, min(256, target // max(1, bytes_per_sample)))
    if n >= 2:
        tn = min(tn, pl.cdiv(n, 2))  # keep >= 2 parallel steps (2 TensorCores on v7x)
    return int(max(1, min(tn, n)))


def temporal_attention_map(x, w1, b1, w2, b2):
    """Compact attention map of shape (N, C, T).  x: (N, C, T, V)."""
    N, C, T, V = x.shape
    C4 = w1.shape[0]
    TV = T * V

    itemsize = jnp.dtype(x.dtype).itemsize
    TN = _pick_tn(N, C * TV * itemsize)
    G = int(pl.cdiv(N, TN))
    N_pad = G * TN

    xr = x.reshape(N, C, TV)                      # lane-dense input presentation
    if N_pad != N:
        xr = jnp.pad(xr, ((0, N_pad - N), (0, 0), (0, 0)))

    # (T*V, T) mean-over-V pooling matrix.
    pool = (jnp.arange(TV)[:, None] // V == jnp.arange(T)[None, :]).astype(jnp.float32) / V

    w1t = jnp.asarray(w1, jnp.float32).T          # (C, C4)
    b1r = jnp.asarray(b1, jnp.float32).reshape(1, C4)
    w2t = jnp.asarray(w2, jnp.float32).T          # (C4, C)
    b2r = jnp.asarray(b2, jnp.float32).reshape(1, C)

    kernel = _make_kernel(C, C4, T, V, TN)

    out = pl.pallas_call(
        kernel,
        out_shape=jax.ShapeDtypeStruct((G, TN * T, C), x.dtype),
        grid_spec=pltpu.PrefetchScalarGridSpec(
            num_scalar_prefetch=0,
            grid=(G,),
            in_specs=[
                pl.BlockSpec((TN, C, TV), lambda n: (n, 0, 0)),
                pl.BlockSpec((TV, T), lambda n: (0, 0)),
                pl.BlockSpec((C, C4), lambda n: (0, 0)),
                pl.BlockSpec((1, C4), lambda n: (0, 0)),
                pl.BlockSpec((C4, C), lambda n: (0, 0)),
                pl.BlockSpec((1, C), lambda n: (0, 0)),
            ],
            out_specs=pl.BlockSpec((None, TN * T, C), lambda n: (n, 0, 0)),
        ),
        compiler_params=pltpu.CompilerParams(
            dimension_semantics=("parallel",),
            # above v5e's 16 MiB default scoped VMEM; within v6e/v7x budgets.
            vmem_limit_bytes=32 * 1024 * 1024,
        ),
    )(xr, pool, w1t, b1r, w2t, b2r)

    # (G, TN*T, C) -> (N_pad, T, C) -> (N, C, T)
    att = out.reshape(N_pad, T, C)[:N].transpose(0, 2, 1)
    return att


def temporal_attention(x, w1, b1, w2, b2):
    """Faithful module output: attention broadcast to x's shape (N, C, T, V)."""
    att = temporal_attention_map(x, w1, b1, w2, b2)
    # expand_as(x): broadcast outside the kernel (free when fused downstream).
    return jnp.broadcast_to(att[..., None], x.shape)


def _reference(x, w1, b1, w2, b2):
    xf = x.astype(jnp.float32)
    xp = jnp.mean(xf, axis=3)                                    # (N, C, T)
    h = jnp.einsum("oc,nct->not", w1, xp) + b1[None, :, :]       # (N, C4, T)
    mu = jnp.mean(h, axis=-1, keepdims=True)
    var = jnp.mean((h - mu) ** 2, axis=-1, keepdims=True)
    h = (h - mu) / jnp.sqrt(var + 1e-5)
    h = jnp.maximum(h, 0.0)
    att = jnp.einsum("oc,nct->not", w2, h) + b2[None, :, :]      # (N, C, T)
    att = jax.nn.sigmoid(att)
    return jnp.broadcast_to(att[..., None], x.shape).astype(x.dtype)


if __name__ == "__main__":
    def _run_case(key, N, C, T, V):
        C4 = C // 4
        kx, k1, k2, k3, k4 = jax.random.split(key, 5)
        x = jax.random.normal(kx, (N, C, T, V), dtype=jnp.float32)
        w1 = jax.random.normal(k1, (C4, C), dtype=jnp.float32) * 0.1   # (C//4, C)
        b1 = jax.random.normal(k2, (C4, 1), dtype=jnp.float32) * 0.1   # (C//4, 1)
        w2 = jax.random.normal(k3, (C, C4), dtype=jnp.float32) * 0.1   # (C, C//4)
        b2 = jax.random.normal(k4, (C, 1), dtype=jnp.float32) * 0.1    # (C, 1)

        out = jax.block_until_ready(temporal_attention(x, w1, b1, w2, b2))
        ref = _reference(x, w1, b1, w2, b2)
        assert out.shape == x.shape
        assert jnp.allclose(out, ref, atol=3e-5, rtol=3e-5), "mismatch vs reference"

    key = jax.random.PRNGKey(0)
    ka, kb = jax.random.split(key)
    # Small shapes consistent with the module (channels divisible by 4).
    _run_case(ka, N=2, C=16, T=8, V=16)
    # Exercises TN > 1 and batch padding (N not divisible by the batch block).
    _run_case(kb, N=5, C=16, T=8, V=16)

    print("KERNEL_OK")
</pallas_src>

<mosaic_0001>
module attributes {stable_mosaic.version = 11 : i64} {
  func.func @kernel(%arg0: i32, %arg1: memref<1x16x128xf32, #tpu.memory_space<vmem>>, %arg2: memref<128x8xf32, #tpu.memory_space<vmem>>, %arg3: memref<16x4xf32, #tpu.memory_space<vmem>>, %arg4: memref<1x4xf32, #tpu.memory_space<vmem>>, %arg5: memref<4x16xf32, #tpu.memory_space<vmem>>, %arg6: memref<1x16xf32, #tpu.memory_space<vmem>>, %arg7: memref<1x8x16xf32, #tpu.memory_space<vmem>>) attributes {dimension_semantics = [#tpu.dimension_semantics<parallel>], iteration_bounds = array<i64: 2>, scalar_prefetch = 0 : i64, scratch_operands = 0 : i64, tpu.core_type = #tpu.core_type<tc>, window_params = [{transform_indices = @transform_0, window_bounds = array<i64: 1, 16, 128>}, {pipeline_mode = #tpu.pipeline_mode<synchronous>, transform_indices = @transform_1, window_bounds = array<i64: 128, 8>}, {pipeline_mode = #tpu.pipeline_mode<synchronous>, transform_indices = @transform_2, window_bounds = array<i64: 16, 4>}, {pipeline_mode = #tpu.pipeline_mode<synchronous>, transform_indices = @transform_3, window_bounds = array<i64: 1, 4>}, {pipeline_mode = #tpu.pipeline_mode<synchronous>, transform_indices = @transform_4, window_bounds = array<i64: 4, 16>}, {pipeline_mode = #tpu.pipeline_mode<synchronous>, transform_indices = @transform_5, window_bounds = array<i64: 1, 16>}, {transform_indices = @transform_6, window_bounds = array<i64: 1, 8, 16>}]} {
    %c0 = arith.constant 0 : index
    %c0_0 = arith.constant 0 : index
    %c0_1 = arith.constant 0 : index
    %0 = vector.load %arg1[%c0, %c0_0, %c0_1] : memref<1x16x128xf32, #tpu.memory_space<vmem>>, vector<1x16x128xf32>
    %1 = vector.shape_cast %0 : vector<1x16x128xf32> to vector<16x128xf32>
    %c0_2 = arith.constant 0 : index
    %c0_3 = arith.constant 0 : index
    %2 = vector.load %arg2[%c0_2, %c0_3] : memref<128x8xf32, #tpu.memory_space<vmem>>, vector<128x8xf32>
    %cst = arith.constant dense<0.000000e+00> : vector<16x8xf32>
    %3 = tpu.matmul %1, %2, %cst {dimension_numbers = #tpu.dot_dimension_numbers<[1], [0], [0], [1], [0, 0, 1, 1], [], []>} : vector<16x128xf32>, vector<128x8xf32>, vector<16x8xf32> -> vector<16x8xf32>
    %4 = vector.shape_cast %3 : vector<16x8xf32> to vector<1x16x8xf32>
    %5 = tpu.transpose %4, [0, 2, 1] : vector<1x16x8xf32> -> vector<1x8x16xf32>
    %6 = vector.shape_cast %5 : vector<1x8x16xf32> to vector<8x16xf32>
    %c0_4 = arith.constant 0 : index
    %c0_5 = arith.constant 0 : index
    %7 = vector.load %arg3[%c0_4, %c0_5] : memref<16x4xf32, #tpu.memory_space<vmem>>, vector<16x4xf32>
    %cst_6 = arith.constant dense<0.000000e+00> : vector<8x4xf32>
    %8 = tpu.matmul %6, %7, %cst_6 {dimension_numbers = #tpu.dot_dimension_numbers<[1], [0], [0], [1], [0, 0, 1, 1], [], []>} : vector<8x16xf32>, vector<16x4xf32>, vector<8x4xf32> -> vector<8x4xf32>
    %c0_7 = arith.constant 0 : index
    %c0_8 = arith.constant 0 : index
    %9 = vector.load %arg4[%c0_7, %c0_8] : memref<1x4xf32, #tpu.memory_space<vmem>>, vector<1x4xf32>
    %10 = vector.broadcast %9 : vector<1x4xf32> to vector<8x4xf32>
    %11 = arith.addf %8, %10 : vector<8x4xf32>
    %12 = vector.shape_cast %11 : vector<8x4xf32> to vector<1x8x4xf32>
    %cst_9 = arith.constant dense<0.000000e+00> : vector<1x4xf32>
    %13 = vector.multi_reduction <add>, %12, %cst_9 [1] : vector<1x8x4xf32> to vector<1x4xf32>
    %14 = vector.shape_cast %13 : vector<1x4xf32> to vector<1x1x4xf32>
    %cst_10 = arith.constant 8.000000e+00 : f32
    %15 = vector.broadcast %cst_10 : f32 to vector<1x1x4xf32>
    %16 = arith.divf %14, %15 : vector<1x1x4xf32>
    %17 = vector.broadcast %16 : vector<1x1x4xf32> to vector<1x8x4xf32>
    %18 = arith.subf %12, %17 : vector<1x8x4xf32>
    %19 = vector.broadcast %16 : vector<1x1x4xf32> to vector<1x8x4xf32>
    %20 = arith.subf %12, %19 : vector<1x8x4xf32>
    %21 = arith.mulf %18, %20 : vector<1x8x4xf32>
    %cst_11 = arith.constant dense<0.000000e+00> : vector<1x4xf32>
    %22 = vector.multi_reduction <add>, %21, %cst_11 [1] : vector<1x8x4xf32> to vector<1x4xf32>
    %23 = vector.shape_cast %22 : vector<1x4xf32> to vector<1x1x4xf32>
    %cst_12 = arith.constant 8.000000e+00 : f32
    %24 = vector.broadcast %cst_12 : f32 to vector<1x1x4xf32>
    %25 = arith.divf %23, %24 : vector<1x1x4xf32>
    %26 = vector.broadcast %16 : vector<1x1x4xf32> to vector<1x8x4xf32>
    %27 = arith.subf %12, %26 : vector<1x8x4xf32>
    %cst_13 = arith.constant 9.99999974E-6 : f32
    %28 = vector.broadcast %cst_13 : f32 to vector<1x1x4xf32>
    %29 = arith.addf %25, %28 : vector<1x1x4xf32>
    %30 = math.rsqrt %29 : vector<1x1x4xf32>
    %31 = vector.broadcast %30 : vector<1x1x4xf32> to vector<1x8x4xf32>
    %32 = arith.mulf %27, %31 : vector<1x8x4xf32>
    %cst_14 = arith.constant 0.000000e+00 : f32
    %33 = vector.broadcast %cst_14 : f32 to vector<1x8x4xf32>
    %34 = arith.maximumf %32, %33 : vector<1x8x4xf32>
    %35 = vector.shape_cast %34 : vector<1x8x4xf32> to vector<8x4xf32>
    %c0_15 = arith.constant 0 : index
    %c0_16 = arith.constant 0 : index
    %36 = vector.load %arg5[%c0_15, %c0_16] : memref<4x16xf32, #tpu.memory_space<vmem>>, vector<4x16xf32>
    %cst_17 = arith.constant dense<0.000000e+00> : vector<8x16xf32>
    %37 = tpu.matmul %35, %36, %cst_17 {dimension_numbers = #tpu.dot_dimension_numbers<[1], [0], [0], [1], [0, 0, 1, 1], [], []>} : vector<8x4xf32>, vector<4x16xf32>, vector<8x16xf32> -> vector<8x16xf32>
    %c0_18 = arith.constant 0 : index
    %c0_19 = arith.constant 0 : index
    %38 = vector.load %arg6[%c0_18, %c0_19] : memref<1x16xf32, #tpu.memory_space<vmem>>, vector<1x16xf32>
    %39 = vector.broadcast %38 : vector<1x16xf32> to vector<8x16xf32>
    %40 = arith.addf %37, %39 : vector<8x16xf32>
    %41 = arith.negf %40 : vector<8x16xf32>
    %42 = math.exp %41 : vector<8x16xf32>
    %cst_20 = arith.constant 1.000000e+00 : f32
    %43 = vector.broadcast %cst_20 : f32 to vector<8x16xf32>
    %44 = arith.addf %43, %42 : vector<8x16xf32>
    %45 = arith.divf %43, %44 : vector<8x16xf32>
    %c0_21 = arith.constant 0 : index
    %c0_22 = arith.constant 0 : index
    %c0_23 = arith.constant 0 : index
    %46 = vector.load %arg7[%c0_21, %c0_22, %c0_23] : memref<1x8x16xf32, #tpu.memory_space<vmem>>, vector<1x8x16xf32>
    %47 = vector.shape_cast %46 : vector<1x8x16xf32> to vector<8x16xf32>
    %48 = vector.shape_cast %45 : vector<8x16xf32> to vector<1x8x16xf32>
    tpu.vector_store %arg7[%c0_21, %c0_22, %c0_23], %48 {strides = array<i32>} : memref<1x8x16xf32, #tpu.memory_space<vmem>>, vector<1x8x16xf32>,
    return
  }
  func.func @transform_0(%arg0: i32) -> (i32, i32, i32) {
    %c0_i32 = arith.constant 0 : i32
    %c0_i32_0 = arith.constant 0 : i32
    %c0_i32_1 = arith.constant 0 : i32
    return %arg0, %c0_i32, %c0_i32_0 : i32, i32, i32
  }
  func.func @transform_1(%arg0: i32) -> (i32, i32) {
    %c0_i32 = arith.constant 0 : i32
    %c0_i32_0 = arith.constant 0 : i32
    %c0_i32_1 = arith.constant 0 : i32
    return %c0_i32, %c0_i32_0 : i32, i32
  }
  func.func @transform_2(%arg0: i32) -> (i32, i32) {
    %c0_i32 = arith.constant 0 : i32
    %c0_i32_0 = arith.constant 0 : i32
    %c0_i32_1 = arith.constant 0 : i32
    return %c0_i32, %c0_i32_0 : i32, i32
  }
  func.func @transform_3(%arg0: i32) -> (i32, i32) {
    %c0_i32 = arith.constant 0 : i32
    %c0_i32_0 = arith.constant 0 : i32
    %c0_i32_1 = arith.constant 0 : i32
    return %c0_i32, %c0_i32_0 : i32, i32
  }
  func.func @transform_4(%arg0: i32) -> (i32, i32) {
    %c0_i32 = arith.constant 0 : i32
    %c0_i32_0 = arith.constant 0 : i32
    %c0_i32_1 = arith.constant 0 : i32
    return %c0_i32, %c0_i32_0 : i32, i32
  }
  func.func @transform_5(%arg0: i32) -> (i32, i32) {
    %c0_i32 = arith.constant 0 : i32
    %c0_i32_0 = arith.constant 0 : i32
    %c0_i32_1 = arith.constant 0 : i32
    return %c0_i32, %c0_i32_0 : i32, i32
  }
  func.func @transform_6(%arg0: i32) -> (i32, i32, i32) {
    %c0_i32 = arith.constant 0 : i32
    %c0_i32_0 = arith.constant 0 : i32
    %c0_i32_1 = arith.constant 0 : i32
    return %arg0, %c0_i32, %c0_i32_0 : i32, i32, i32
  }
}

</mosaic_0001>

<llo_original>
// kernel: tpu_custom_call.1
$region0: #{tpu_custom_call.1}
  #allocation0 [shape = 'u32[]', space=smem, size = 0x4, offset = 0x4, fixed_abs, tag = 'smem constant byte address 0x4 - core index']
  #allocation1 [shape = 'u32[144,128]{1,0:T(1,128)}', space=vmem, size = 0x12000, scoped, tag = 'internal scratch']
  %s0 = inlined_call_operand.vmem [shape: f32[2,16,128], index: 0, kind: input, shape index: {}]
  %s1 = inlined_call_operand.vmem [shape: f32[128,8], index: 1, kind: input, shape index: {}]
  %s2 = inlined_call_operand.vmem [shape: f32[16,4], index: 2, kind: input, shape index: {}]
  %s3 = inlined_call_operand.vmem [shape: f32[1,4], index: 3, kind: input, shape index: {}]
  %s4 = inlined_call_operand.vmem [shape: f32[4,16], index: 4, kind: input, shape index: {}]
  %s5 = inlined_call_operand.vmem [shape: f32[1,16], index: 5, kind: input, shape index: {}]
  %s6 = inlined_call_operand.hbm [shape: f32[2,8,16], index: 6, kind: output, shape index: {}]
  %s7 = sld [smem:[#allocation0]]
  $region57: #{tpu_custom_call.1} parent=0
    _
  %s9 = ssub.s32 1, %s7
  %s10 = scalar_select 0, %s9, %s7
  $region1: #{tpu_custom_call.1} parent=0
    #allocation2 [shape = 'u8[8192]{0}', space=vmem, size = 0x2000, scoped, tag = 'output window, operand 0']
    #allocation3 [shape = 's32[2]{0}', space=sflag, size = 0x8, scoped, tag = 'scoped memory for tpu_custom_call.1']
    %11 = vsyncpa [#allocation3], 0
    %s12 = scalar_lea.sflag [#allocation3], 1
    %13 = vsyncpa %s12, 0
    loop: start=0, step=1, limit=4
    $region2: #{tpu_custom_call.1} parent=1 // loop_pre_header
      _
    $region3: #{tpu_custom_call.1} parent=1 // loop_header
      %s15 = sphi 0, %s19
      %p16 = scmp.ge.s32.totalorder %s15, 4
      %s25 = sphi 0, %s27
      %s28 = sphi 0, %s25
      %s29 = sphi 0, %s28
      %s45 = sphi 0, %s29
      %s49 = sphi 0, %s49
      %s51 = sphi 0, %s49
      %s52 = sphi 0, %s51
      %s66 = sphi 0, %s52
      %s70 = sphi 0, %s70
      %s72 = sphi 0, %s70
      %s73 = sphi 0, %s72
      %s87 = sphi 0, %s73
      %s91 = sphi 0, %s91
      %s93 = sphi 0, %s91
      %s94 = sphi 0, %s93
      %s108 = sphi 0, %s94
      %s112 = sphi 0, %s112
      %s114 = sphi 0, %s112
      %s115 = sphi 0, %s114
      %s129 = sphi 0, %s115
      %s133 = sphi 0, %s133
      %s135 = sphi 0, %s133
      %s136 = sphi 0, %s135
      %s150 = sphi 0, %s136
      %s156 = sphi 0, %s158
      %s159 = sphi 0, %s156
      %s160 = sphi 0, %s159
      %s176 = sphi 0, %s160
    $region4: #{tpu_custom_call.1} parent=1 // loop_header_branch
      %18 = sbr.rel (%p16) target = $region8
    $region5: #{tpu_custom_call.1} parent=1 // loop_body
      %s20 = ssub.s32 %s15, 1
      %s21 = ssub.s32 %s15, 2
      %s22 = sadd.s32 %s15, 1
      %s23 = ssub.s32 %s15, %s22
      %p24 = scmp.eq.s32.totalorder %s23, 0
      %s26 = sadd.s32 %s25, 1
      %s27 = scalar_select %p24, %s25, %s26
      %p30 = pneg %p24
      %p31 = scmp.eq.s32.totalorder %s15, 1
      %p32 = por %p30, %p31
      %p33 = scmp.ne.s32.totalorder %s25, %s28
      %p34 = scmp.eq.s32.totalorder %s15, 0
      %p35 = por %p33, %p34
      %p36 = scmp.ne.s32.totalorder %s25, %s28
      %p37 = scmp.eq.s32.totalorder %s20, 1
      %p38 = por %p36, %p37
      %p39 = scmp.ne.s32.totalorder %s28, %s29
      %p40 = scmp.eq.s32.totalorder %s20, 0
      %p41 = por %p39, %p40
      %p42 = scmp.ne.s32.totalorder %s28, %s29
      %p43 = scmp.eq.s32.totalorder %s21, 1
      %p44 = por %p42, %p43
      %p46 = scmp.ne.s32.totalorder %s29, %s45
      %p47 = scmp.eq.s32.totalorder %s21, 0
      %p48 = por %p46, %p47
      %s50 = sadd.s32 %s49, 1
      %p53 = scmp.eq.s32.totalorder %s15, 1
      %p54 = scmp.ne.s32.totalorder %s49, %s51
      %p55 = scmp.eq.s32.totalorder %s15, 0
      %p56 = por %p54, %p55
      %p57 = scmp.ne.s32.totalorder %s49, %s51
      %p58 = scmp.eq.s32.totalorder %s20, 1
      %p59 = por %p57, %p58
      %p60 = scmp.ne.s32.totalorder %s51, %s52
      %p61 = scmp.eq.s32.totalorder %s20, 0
      %p62 = por %p60, %p61
      %p63 = scmp.ne.s32.totalorder %s51, %s52
      %p64 = scmp.eq.s32.totalorder %s21, 1
      %p65 = por %p63, %p64
      %p67 = scmp.ne.s32.totalorder %s52, %s66
      %p68 = scmp.eq.s32.totalorder %s21, 0
      %p69 = por %p67, %p68
      %s71 = sadd.s32 %s70, 1
      %p74 = scmp.eq.s32.totalorder %s15, 1
      %p75 = scmp.ne.s32.totalorder %s70, %s72
      %p76 = scmp.eq.s32.totalorder %s15, 0
      %p77 = por %p75, %p76
      %p78 = scmp.ne.s32.totalorder %s70, %s72
      %p79 = scmp.eq.s32.totalorder %s20, 1
      %p80 = por %p78, %p79
      %p81 = scmp.ne.s32.totalorder %s72, %s73
      %p82 = scmp.eq.s32.totalorder %s20, 0
      %p83 = por %p81, %p82
      %p84 = scmp.ne.s32.totalorder %s72, %s73
      %p85 = scmp.eq.s32.totalorder %s21, 1
      %p86 = por %p84, %p85
      %p88 = scmp.ne.s32.totalorder %s73, %s87
      %p89 = scmp.eq.s32.totalorder %s21, 0
      %p90 = por %p88, %p89
      %s92 = sadd.s32 %s91, 1
      %p95 = scmp.eq.s32.totalorder %s15, 1
      %p96 = scmp.ne.s32.totalorder %s91, %s93
      %p97 = scmp.eq.s32.totalorder %s15, 0
      %p98 = por %p96, %p97
      %p99 = scmp.ne.s32.totalorder %s91, %s93
      %p100 = scmp.eq.s32.totalorder %s20, 1
      %p101 = por %p99, %p100
      %p102 = scmp.ne.s32.totalorder %s93, %s94
      %p103 = scmp.eq.s32.totalorder %s20, 0
      %p104 = por %p102, %p103
      %p105 = scmp.ne.s32.totalorder %s93, %s94
      %p106 = scmp.eq.s32.totalorder %s21, 1
      %p107 = por %p105, %p106
      %p109 = scmp.ne.s32.totalorder %s94, %s108
      %p110 = scmp.eq.s32.totalorder %s21, 0
      %p111 = por %p109, %p110
      %s113 = sadd.s32 %s112, 1
      %p116 = scmp.eq.s32.totalorder %s15, 1
      %p117 = scmp.ne.s32.totalorder %s112, %s114
      %p118 = scmp.eq.s32.totalorder %s15, 0
      %p119 = por %p117, %p118
      %p120 = scmp.ne.s32.totalorder %s112, %s114
      %p121 = scmp.eq.s32.totalorder %s20, 1
      %p122 = por %p120, %p121
      %p123 = scmp.ne.s32.totalorder %s114, %s115
      %p124 = scmp.eq.s32.totalorder %s20, 0
      %p125 = por %p123, %p124
      %p126 = scmp.ne.s32.totalorder %s114, %s115
      %p127 = scmp.eq.s32.totalorder %s21, 1
      %p128 = por %p126, %p127
      %p130 = scmp.ne.s32.totalorder %s115, %s129
      %p131 = scmp.eq.s32.totalorder %s21, 0
      %p132 = por %p130, %p131
      %s134 = sadd.s32 %s133, 1
      %p137 = scmp.eq.s32.totalorder %s15, 1
      %p138 = scmp.ne.s32.totalorder %s133, %s135
      %p139 = scmp.eq.s32.totalorder %s15, 0
      %p140 = por %p138, %p139
      %p141 = scmp.ne.s32.totalorder %s133, %s135
      %p142 = scmp.eq.s32.totalorder %s20, 1
      %p143 = por %p141, %p142
      %p144 = scmp.ne.s32.totalorder %s135, %s136
      %p145 = scmp.eq.s32.totalorder %s20, 0
      %p146 = por %p144, %p145
      %p147 = scmp.ne.s32.totalorder %s135, %s136
      %p148 = scmp.eq.s32.totalorder %s21, 1
      %p149 = por %p147, %p148
      %p151 = scmp.ne.s32.totalorder %s136, %s150
      %p152 = scmp.eq.s32.totalorder %s21, 0
      %p153 = por %p151, %p152
      %s154 = ssub.s32 %s15, %s22
      %p155 = scmp.eq.s32.totalorder %s154, 0
      %s157 = sadd.s32 %s156, 1
      %s158 = scalar_select %p155, %s156, %s157
      %p161 = pneg %p155
      %p162 = scmp.eq.s32.totalorder %s15, 1
      %p163 = por %p161, %p162
      %p164 = scmp.ne.s32.totalorder %s156, %s159
      %p165 = scmp.eq.s32.totalorder %s15, 0
      %p166 = por %p164, %p165
      %p167 = scmp.ne.s32.totalorder %s156, %s159
      %p168 = scmp.eq.s32.totalorder %s20, 1
      %p169 = por %p167, %p168
      %p170 = scmp.ne.s32.totalorder %s159, %s160
      %p171 = scmp.eq.s32.totalorder %s20, 0
      %p172 = por %p170, %p171
      %p173 = scmp.ne.s32.totalorder %s159, %s160
      %p174 = scmp.eq.s32.totalorder %s21, 1
      %p175 = por %p173, %p174
      %p177 = scmp.ne.s32.totalorder %s160, %s176
      %p178 = scmp.eq.s32.totalorder %s21, 0
      %p179 = por %p177, %p178
      %p180 = scmp.le.s32.totalorder 1, %s15
      %p181 = scmp.lt.s32.totalorder %s15, 3
      %p182 = pnand %p180, %p181
      %p183 = pneg %p182
      // Predicated region
      $region9: #{tpu_custom_call.1} parent=5 // pred_check
        _
      $region10: #{tpu_custom_call.1} parent=5 // pred_check_branch
        %185 = sbr.rel (%p182) target = $region12
      $region11: #{tpu_custom_call.1} parent=5 // pred_region
        %s186 = ssub.s32 %s15, 1
        // Predicated region
        $region13: #{tpu_custom_call.1} parent=11 // pred_check
          %p187 = pneg %p62
        $region14: #{tpu_custom_call.1} parent=11 // pred_check_branch
          %189 = sbr.rel (%p187) target = $region16
        $region15: #{tpu_custom_call.1} parent=11 // pred_region
          _
        $region16: #{tpu_custom_call.1} parent=11 // pred_fallthru
          _
        // Predicated region
        $region17: #{tpu_custom_call.1} parent=11 // pred_check
          %p190 = pneg %p83
        $region18: #{tpu_custom_call.1} parent=11 // pred_check_branch
          %192 = sbr.rel (%p190) target = $region20
        $region19: #{tpu_custom_call.1} parent=11 // pred_region
          _
        $region20: #{tpu_custom_call.1} parent=11 // pred_fallthru
          _
        // Predicated region
        $region21: #{tpu_custom_call.1} parent=11 // pred_check
          %p193 = pneg %p104
        $region22: #{tpu_custom_call.1} parent=11 // pred_check_branch
          %195 = sbr.rel (%p193) target = $region24
        $region23: #{tpu_custom_call.1} parent=11 // pred_region
          _
        $region24: #{tpu_custom_call.1} parent=11 // pred_fallthru
          _
        // Predicated region
        $region25: #{tpu_custom_call.1} parent=11 // pred_check
          %p196 = pneg %p125
        $region26: #{tpu_custom_call.1} parent=11 // pred_check_branch
          %198 = sbr.rel (%p196) target = $region28
        $region27: #{tpu_custom_call.1} parent=11 // pred_region
          _
        $region28: #{tpu_custom_call.1} parent=11 // pred_fallthru
          _
        // Predicated region
        $region29: #{tpu_custom_call.1} parent=11 // pred_check
          %p199 = pneg %p146
        $region30: #{tpu_custom_call.1} parent=11 // pred_check_branch
          %201 = sbr.rel (%p199) target = $region32
        $region31: #{tpu_custom_call.1} parent=11 // pred_region
          _
        $region32: #{tpu_custom_call.1} parent=11 // pred_fallthru
          _
      $region12: #{tpu_custom_call.1} parent=5 // pred_fallthru
        _
      %p202 = scmp.lt.s32.totalorder %s15, 2
      // Predicated region
      $region33: #{tpu_custom_call.1} parent=5 // pred_check
        %p203 = pneg %p202
      $region34: #{tpu_custom_call.1} parent=5 // pred_check_branch
        %205 = sbr.rel (%p203) target = $region36
      $region35: #{tpu_custom_call.1} parent=5 // pred_region
        // Predicated region
        $region37: #{tpu_custom_call.1} parent=35 // pred_check
          %p206 = pneg %p35
        $region38: #{tpu_custom_call.1} parent=35 // pred_check_branch
          %208 = sbr.rel (%p206) target = $region40
        $region39: #{tpu_custom_call.1} parent=35 // pred_region
          %p209 = scmp.lt.s32.totalorder %s15, 1
          %s210 = scalar_select %p209, %s15, 1
          %s211 = smul.addr %s210, 2
          %s212 = smul.addr %s211, 8
          %s213 = scalar_lea.vmem %s0, %s212
        $region40: #{tpu_custom_call.1} parent=35 // pred_fallthru
          _
      $region36: #{tpu_custom_call.1} parent=5 // pred_fallthru
        _
      %p214 = scmp.le.s32.totalorder 1, %s15
      %p215 = scmp.lt.s32.totalorder %s15, 3
      %p216 = pnand %p214, %p215
      %p217 = pneg %p216
      // Predicated region
      $region41: #{tpu_custom_call.1} parent=5 // pred_check
        _
      $region42: #{tpu_custom_call.1} parent=5 // pred_check_branch
        %219 = sbr.rel (%p216) target = $region44
      $region43: #{tpu_custom_call.1} parent=5 // pred_region
        %s220 = ssub.s32 %s15, 1
        %p221 = scmp.lt.s32.totalorder %s20, 1
        %s222 = scalar_select %p221, %s20, 1
        %s223 = smul.addr %s222, 2
        %s224 = smul.addr %s223, 8
        %s225 = scalar_lea.vmem %s0, %s224
        %p226 = pneg %p41
        %p227 = pneg %p38
        %p228 = pneg %p62
        %p229 = pneg %p59
        %p230 = pneg %p83
        %p231 = pneg %p80
        %p232 = pneg %p104
        %p233 = pneg %p101
        %p234 = pneg %p125
        %p235 = pneg %p122
        %p236 = pneg %p146
        %p237 = pneg %p143
        %p238 = pneg %p172
        %p239 = pneg %p169
        %s240 = sand.u32 %s159, 1
        %s241 = scalar_lea.sflag [#allocation3], %s240
        %s242 = sand.u32 %s159, 1
        %s243 = smul.addr %s242, 8
        %s244 = scalar_lea.vmem [#allocation2], %s243
        %p245 = scmp.lt.s32.totalorder %s20, 1
        %s246 = scalar_select %p245, %s20, 1
        %s247 = smul.addr %s246, 2
        %s248 = smul.addr %s247, 8
        %s249 = scalar_lea.vmem %s0, %s248
        %v250 = vld [vmem:[%s249] sm:$0xff]
        %v251 = vld [vmem:[%s249 + $0x8] sm:$0xff]
        %v252 = vld [vmem:[%s1] sm:$0xff]
        %v253 = vld [vmem:[%s1 + $0x8] sm:$0xff]
        %v254 = vld [vmem:[%s1 + $0x10] sm:$0xff]
        %v255 = vld [vmem:[%s1 + $0x18] sm:$0xff]
        %v256 = vld [vmem:[%s1 + $0x20] sm:$0xff]
        %v257 = vld [vmem:[%s1 + $0x28] sm:$0xff]
        %v258 = vld [vmem:[%s1 + $0x30] sm:$0xff]
        %v259 = vld [vmem:[%s1 + $0x38] sm:$0xff]
        %v260 = vld [vmem:[%s1 + $0x40] sm:$0xff]
        %v261 = vld [vmem:[%s1 + $0x48] sm:$0xff]
        %v262 = vld [vmem:[%s1 + $0x50] sm:$0xff]
        %v263 = vld [vmem:[%s1 + $0x58] sm:$0xff]
        %v264 = vld [vmem:[%s1 + $0x60] sm:$0xff]
        %v265 = vld [vmem:[%s1 + $0x68] sm:$0xff]
        %v266 = vld [vmem:[%s1 + $0x70] sm:$0xff]
        %v267 = vld [vmem:[%s1 + $0x78] sm:$0xff]
        %268 = vmatprep.subr.mxu0 0.0
        %269 = vmatpush1.msra.mxu0 %v252
        %270 = vmatprep.subr.mxu0 0.0
        %271 = vmatpush1.msra.mxu0 %v253
        %272 = vmatprep.subr.mxu0 0.0
        %273 = vmatpush1.msra.mxu0 %v254
        %274 = vmatprep.subr.mxu0 0.0
        %275 = vmatpush1.msra.mxu0 %v255
        %276 = vmatprep.subr.mxu0 0.0
        %277 = vmatpush1.msra.mxu0 %v256
        %278 = vmatprep.subr.mxu0 0.0
        %279 = vmatpush1.msra.mxu0 %v257
        %280 = vmatprep.subr.mxu0 0.0
        %281 = vmatpush1.msra.mxu0 %v258
        %282 = vmatprep.subr.mxu0 0.0
        %283 = vmatpush1.msra.mxu0 %v259
        %284 = vmatprep.subr.mxu0 0.0
        %285 = vmatpush1.msra.mxu0 %v260
        %286 = vmatprep.subr.mxu0 0.0
        %287 = vmatpush1.msra.mxu0 %v261
        %288 = vmatprep.subr.mxu0 0.0
        %289 = vmatpush1.msra.mxu0 %v262
        %290 = vmatprep.subr.mxu0 0.0
        %291 = vmatpush1.msra.mxu0 %v263
        %292 = vmatprep.subr.mxu0 0.0
        %293 = vmatpush1.msra.mxu0 %v264
        %294 = vmatprep.subr.mxu0 0.0
        %295 = vmatpush1.msra.mxu0 %v265
        %296 = vmatprep.subr.mxu0 0.0
        %297 = vmatpush1.msra.mxu0 %v266
        %298 = vmatprep.subr.mxu0 0.0
        %299 = vmatpush1.msra.mxu0 %v267
        %300 = vmatprep.subr.mxu0 0.0
        %301 = vmatpush1.msra.mxu0 0.0
        %302 = vmatprep.subr.mxu0 0.0
        %303 = vmatpush1.msra.mxu0 0.0
        %304 = vmatprep.subr.mxu0 0.0
        %305 = vmatpush1.msra.mxu0 0.0
        %306 = vmatprep.subr.mxu0 0.0
        %307 = vmatpush1.msra.mxu0 0.0
        %308 = vmatprep.subr.mxu0 0.0
        %309 = vmatpush1.msra.mxu0 0.0
        %310 = vmatprep.subr.mxu0 0.0
        %311 = vmatpush1.msra.mxu0 0.0
        %312 = vmatprep.subr.mxu0 0.0
        %313 = vmatpush1.msra.mxu0 0.0
        %314 = vmatprep.subr.mxu0 0.0
        %315 = vmatpush1.msra.mxu0 0.0
        %316 = vmatprep.subr.mxu0 0.0
        %317 = vmatpush1.msra.mxu0 0.0
        %318 = vmatprep.subr.mxu0 0.0
        %319 = vmatpush1.msra.mxu0 0.0
        %320 = vmatprep.subr.mxu0 0.0
        %321 = vmatpush1.msra.mxu0 0.0
        %322 = vmatprep.subr.mxu0 0.0
        %323 = vmatpush1.msra.mxu0 0.0
        %324 = vmatprep.subr.mxu0 0.0
        %325 = vmatpush1.msra.mxu0 0.0
        %326 = vmatprep.subr.mxu0 0.0
        %327 = vmatpush1.msra.mxu0 0.0
        %328 = vmatprep.subr.mxu0 0.0
        %329 = vmatpush1.msra.mxu0 0.0
        %330 = vmatprep.subr.mxu0 0.0
        %331 = vmatpush1.msra.mxu0 0.0
        %332 = vmatprep.mubr.f32.mxu0 0.0
        %333 = vmatmul.mubr.f32.gmra.mrb[0].mxu0 %v250
        %v334 = vpop.f32.mrb[0].mxu0
        %v335 = vadd.f32 0.0, %v334
        %v336 = vpop.f32.mrb[0].mxu0
        %337 = vmatprep.mubr.f32.mxu0 0.0
        %338 = vmatmul.mubr.f32.gmra.mrb[0].mxu0 %v251
        %v339 = vpop.f32.mrb[0].mxu0
        %v340 = vadd.f32 0.0, %v339
        %v341 = vpop.f32.mrb[0].mxu0
        %342 = vdwg.mxu0
        %343 = vxpose.xlu0.b32.start [1/16] %v335, 128
        %344 = vxpose.xlu0.b32.cont [2/16] %v340, 128
        %345 = vxpose.xlu0.b32.cont [3/16] 0.0, 128
        %346 = vxpose.xlu0.b32.cont [4/16] 0.0, 128
        %347 = vxpose.xlu0.b32.cont [5/16] 0.0, 128
        %348 = vxpose.xlu0.b32.cont [6/16] 0.0, 128
        %349 = vxpose.xlu0.b32.cont [7/16] 0.0, 128
        %350 = vxpose.xlu0.b32.cont [8/16] 0.0, 128
        %351 = vxpose.xlu0.b32.cont [9/16] 0.0, 128
        %352 = vxpose.xlu0.b32.cont [10/16] 0.0, 128
        %353 = vxpose.xlu0.b32.cont [11/16] 0.0, 128
        %354 = vxpose.xlu0.b32.cont [12/16] 0.0, 128
        %355 = vxpose.xlu0.b32.cont [13/16] 0.0, 128
        %356 = vxpose.xlu0.b32.cont [14/16] 0.0, 128
        %357 = vxpose.xlu0.b32.cont [15/16] 0.0, 128
        %358 = vxpose.xlu0.b32.end [16/16] 0.0, 128
        %v359 = vpop.trf.xlu0
        %v360 = vpop.trf.xlu0
        %v361 = vpop.trf.xlu0
        %v362 = vpop.trf.xlu0
        %v363 = vpop.trf.xlu0
        %v364 = vpop.trf.xlu0
        %v365 = vpop.trf.xlu0
        %v366 = vpop.trf.xlu0
        %v367 = vpop.trf.xlu0
        %v368 = vpop.trf.xlu0
        %v369 = vpop.trf.xlu0
        %v370 = vpop.trf.xlu0
        %v371 = vpop.trf.xlu0
        %v372 = vpop.trf.xlu0
        %v373 = vpop.trf.xlu0
        %v374 = vpop.trf.xlu0
        %v375 = vld [vmem:[%s2] sm:$0xff]
        %v376 = vld [vmem:[%s2 + $0x8] sm:$0xff]
        %v377 = vld [vmem:[%s3] sm:$0x1]
        %v379 = vlaneseq
        %v380 = vshrl.u32 %v379, 7
        %v381 = vsub.s32 0, %v380
        %v382 = vrot.slane %v377, %v381
        %vm384 = vcmask 130048
        %v386 = vsel %vm384, %v359, 0
        %388 = vmatprep.subr.mxu0 0.0
        %389 = vmatpush1.msra.mxu0 %v375
        %390 = vmatprep.subr.mxu0 0.0
        %391 = vmatpush1.msra.mxu0 %v376
        %392 = vmatprep.subr.mxu0 0.0
        %393 = vmatpush1.msra.mxu0 0.0
        %394 = vmatprep.subr.mxu0 0.0
        %395 = vmatpush1.msra.mxu0 0.0
        %396 = vmatprep.subr.mxu0 0.0
        %397 = vmatpush1.msra.mxu0 0.0
        %398 = vmatprep.subr.mxu0 0.0
        %399 = vmatpush1.msra.mxu0 0.0
        %400 = vmatprep.subr.mxu0 0.0
        %401 = vmatpush1.msra.mxu0 0.0
        %402 = vmatprep.subr.mxu0 0.0
        %403 = vmatpush1.msra.mxu0 0.0
        %404 = vmatprep.subr.mxu0 0.0
        %405 = vmatpush1.msra.mxu0 0.0
        %406 = vmatprep.subr.mxu0 0.0
        %407 = vmatpush1.msra.mxu0 0.0
        %408 = vmatprep.subr.mxu0 0.0
        %409 = vmatpush1.msra.mxu0 0.0
        %410 = vmatprep.subr.mxu0 0.0
        %411 = vmatpush1.msra.mxu0 0.0
        %412 = vmatprep.subr.mxu0 0.0
        %413 = vmatpush1.msra.mxu0 0.0
        %414 = vmatprep.subr.mxu0 0.0
        %415 = vmatpush1.msra.mxu0 0.0
        %416 = vmatprep.subr.mxu0 0.0
        %417 = vmatpush1.msra.mxu0 0.0
        %418 = vmatprep.subr.mxu0 0.0
        %419 = vmatpush1.msra.mxu0 0.0
        %420 = vmatprep.subr.mxu0 0.0
        %421 = vmatpush1.msra.mxu0 0.0
        %422 = vmatprep.subr.mxu0 0.0
        %423 = vmatpush1.msra.mxu0 0.0
        %424 = vmatprep.subr.mxu0 0.0
        %425 = vmatpush1.msra.mxu0 0.0
        %426 = vmatprep.subr.mxu0 0.0
        %427 = vmatpush1.msra.mxu0 0.0
        %428 = vmatprep.subr.mxu0 0.0
        %429 = vmatpush1.msra.mxu0 0.0
        %430 = vmatprep.subr.mxu0 0.0
        %431 = vmatpush1.msra.mxu0 0.0
        %432 = vmatprep.subr.mxu0 0.0
        %433 = vmatpush1.msra.mxu0 0.0
        %434 = vmatprep.subr.mxu0 0.0
        %435 = vmatpush1.msra.mxu0 0.0
        %436 = vmatprep.subr.mxu0 0.0
        %437 = vmatpush1.msra.mxu0 0.0
        %438 = vmatprep.subr.mxu0 0.0
        %439 = vmatpush1.msra.mxu0 0.0
        %440 = vmatprep.subr.mxu0 0.0
        %441 = vmatpush1.msra.mxu0 0.0
        %442 = vmatprep.subr.mxu0 0.0
        %443 = vmatpush1.msra.mxu0 0.0
        %444 = vmatprep.subr.mxu0 0.0
        %445 = vmatpush1.msra.mxu0 0.0
        %446 = vmatprep.subr.mxu0 0.0
        %447 = vmatpush1.msra.mxu0 0.0
        %448 = vmatprep.subr.mxu0 0.0
        %449 = vmatpush1.msra.mxu0 0.0
        %450 = vmatprep.subr.mxu0 0.0
        %451 = vmatpush1.msra.mxu0 0.0
        %452 = vmatprep.mubr.f32.mxu0 0.0
        %453 = vmatmul.mubr.f32.gmra.mrb[0].mxu0 %v386
        %v454 = vpop.f32.mrb[0].mxu0
        %v455 = vadd.f32 %v382, %v454
        %v456 = vpop.f32.mrb[0].mxu0
        %457 = vdwg.mxu0
        %vm458 = vcmask 31744
        %v459 = vsel %vm458, %v455, 0.0
        %v460 = vrot.slane %v459, 4
        %v461 = vadd.f32 %v459, %v460
        %v462 = vrot.slane %v461, 2
        %v463 = vadd.f32 %v461, %v462
        %v464 = vrot.slane %v463, 1
        %v465 = vadd.f32 %v463, %v464
        %v466 = vrcp.pop 8.0
        %v467 = vmul.f32 %v465, %v466
        %v468 = vsub.f32 %v455, %v467
        %v469 = vmul.f32 %v468, %v468
        %v470 = vsel %vm458, %v469, 0.0
        %v471 = vrot.slane %v470, 4
        %v472 = vadd.f32 %v470, %v471
        %v473 = vrot.slane %v472, 2
        %v474 = vadd.f32 %v472, %v473
        %v475 = vrot.slane %v474, 1
        %v476 = vadd.f32 %v474, %v475
        %v477 = vmul.f32 %v476, %v466
        %v478 = vadd.f32 %v477, 1e-05
        %v479 = vrsqrt.pop %v478
        %v480 = vmul.f32 %v468, %v479
        %v481 = vmax.f32 %v480, 0.0
        %v482 = vld [vmem:[%s4] sm:$0xf]
        %v483 = vld [vmem:[%s5] sm:$0x1]
        %v485 = vlaneseq
        %v486 = vshrl.u32 %v485, 7
        %v487 = vsub.s32 0, %v486
        %v488 = vrot.slane %v483, %v487
        %v491 = vsel %vm458, %v481, 0
        %vm493 = vcmask 1043456
        %v495 = vsel %vm493, %v482, 0
        %497 = vmatprep.subr.mxu0 0.0
        %498 = vmatpush1.msra.mxu0 %v495
        %499 = vmatprep.subr.mxu0 0.0
        %500 = vmatpush1.msra.mxu0 0.0
        %501 = vmatprep.subr.mxu0 0.0
        %502 = vmatpush1.msra.mxu0 0.0
        %503 = vmatprep.subr.mxu0 0.0
        %504 = vmatpush1.msra.mxu0 0.0
        %505 = vmatprep.subr.mxu0 0.0
        %506 = vmatpush1.msra.mxu0 0.0
        %507 = vmatprep.subr.mxu0 0.0
        %508 = vmatpush1.msra.mxu0 0.0
        %509 = vmatprep.subr.mxu0 0.0
        %510 = vmatpush1.msra.mxu0 0.0
        %511 = vmatprep.subr.mxu0 0.0
        %512 = vmatpush1.msra.mxu0 0.0
        %513 = vmatprep.subr.mxu0 0.0
        %514 = vmatpush1.msra.mxu0 0.0
        %515 = vmatprep.subr.mxu0 0.0
        %516 = vmatpush1.msra.mxu0 0.0
        %517 = vmatprep.subr.mxu0 0.0
        %518 = vmatpush1.msra.mxu0 0.0
        %519 = vmatprep.subr.mxu0 0.0
        %520 = vmatpush1.msra.mxu0 0.0
        %521 = vmatprep.subr.mxu0 0.0
        %522 = vmatpush1.msra.mxu0 0.0
        %523 = vmatprep.subr.mxu0 0.0
        %524 = vmatpush1.msra.mxu0 0.0
        %525 = vmatprep.subr.mxu0 0.0
        %526 = vmatpush1.msra.mxu0 0.0
        %527 = vmatprep.subr.mxu0 0.0
        %528 = vmatpush1.msra.mxu0 0.0
        %529 = vmatprep.subr.mxu0 0.0
        %530 = vmatpush1.msra.mxu0 0.0
        %531 = vmatprep.subr.mxu0 0.0
        %532 = vmatpush1.msra.mxu0 0.0
        %533 = vmatprep.subr.mxu0 0.0
        %534 = vmatpush1.msra.mxu0 0.0
        %535 = vmatprep.subr.mxu0 0.0
        %536 = vmatpush1.msra.mxu0 0.0
        %537 = vmatprep.subr.mxu0 0.0
        %538 = vmatpush1.msra.mxu0 0.0
        %539 = vmatprep.subr.mxu0 0.0
        %540 = vmatpush1.msra.mxu0 0.0
        %541 = vmatprep.subr.mxu0 0.0
        %542 = vmatpush1.msra.mxu0 0.0
        %543 = vmatprep.subr.mxu0 0.0
        %544 = vmatpush1.msra.mxu0 0.0
        %545 = vmatprep.subr.mxu0 0.0
        %546 = vmatpush1.msra.mxu0 0.0
        %547 = vmatprep.subr.mxu0 0.0
        %548 = vmatpush1.msra.mxu0 0.0
        %549 = vmatprep.subr.mxu0 0.0
        %550 = vmatpush1.msra.mxu0 0.0
        %551 = vmatprep.subr.mxu0 0.0
        %552 = vmatpush1.msra.mxu0 0.0
        %553 = vmatprep.subr.mxu0 0.0
        %554 = vmatpush1.msra.mxu0 0.0
        %555 = vmatprep.subr.mxu0 0.0
        %556 = vmatpush1.msra.mxu0 0.0
        %557 = vmatprep.subr.mxu0 0.0
        %558 = vmatpush1.msra.mxu0 0.0
        %559 = vmatprep.subr.mxu0 0.0
        %560 = vmatpush1.msra.mxu0 0.0
        %561 = vmatprep.mubr.f32.mxu0 0.0
        %562 = vmatmul.mubr.f32.gmra.mrb[0].mxu0 %v491
        %v563 = vpop.f32.mrb[0].mxu0
        %v564 = vadd.f32 %v488, %v563
        %v565 = vpop.f32.mrb[0].mxu0
        %566 = vdwg.mxu0
        %v567 = vxor.u32 %v564, 2147483648
        %v568 = vmul.f32 %v567, 1.442695
        %v569 = vpow.pop %v568
        %v570 = vadd.f32 %v569, 1.0
        %v571 = vrcp.pop %v570
        %v572 = vmul.f32 1.0, %v571
        %573 = vst.msk [vmem:[%s244] sm:$0xff] %vm384, %v572
        %s574 = sand.u32 %s159, 1
        %s575 = scalar_lea.sflag [#allocation3], %s574
        %s576 = sand.u32 %s159, 1
        %s577 = smul.addr %s576, 8
        %s578 = scalar_lea.vmem [#allocation2], %s577
        // Predicated region
        $region45: #{tpu_custom_call.1} parent=43 // pred_check
          %p579 = pneg %p169
        $region46: #{tpu_custom_call.1} parent=43 // pred_check_branch
          %581 = sbr.rel (%p579) target = $region48
        $region47: #{tpu_custom_call.1} parent=43 // pred_region
          %s583 = ssub.s32 128, 128
          %584 = vsyncadd %s575, %s583
          %s585 = smul.addr %s20, 128
          %s586 = scalar_lea.hbm %s6, %s585
          %s588 = sshll.u32 %s578, 4
          %s589 = int_to_ptr.vmem [resolvable:$true] %s588
          %591 = dma.vmem_to_hbm [thread:$0]  %s589, 128, %s586, %s575
        $region48: #{tpu_custom_call.1} parent=43 // pred_fallthru
          _
      $region44: #{tpu_custom_call.1} parent=5 // pred_fallthru
        _
      %p592 = scmp.le.s32.totalorder 2, %s15
      // Predicated region
      $region49: #{tpu_custom_call.1} parent=5 // pred_check
        %p593 = pneg %p592
      $region50: #{tpu_custom_call.1} parent=5 // pred_check_branch
        %595 = sbr.rel (%p593) target = $region52
      $region51: #{tpu_custom_call.1} parent=5 // pred_region
        %s596 = ssub.s32 %s15, 2
        // Predicated region
        $region53: #{tpu_custom_call.1} parent=51 // pred_check
          %p597 = pneg %p175
        $region54: #{tpu_custom_call.1} parent=51 // pred_check_branch
          %599 = sbr.rel (%p597) target = $region56
        $region55: #{tpu_custom_call.1} parent=51 // pred_region
          %s600 = sand.u32 %s160, 1
          %s601 = scalar_lea.sflag [#allocation3], %s600
          %s602 = sand.u32 %s160, 1
          %s603 = smul.addr %s602, 8
          %s604 = scalar_lea.vmem [#allocation2], %s603
          %605 = dma.done %s601, 128
        $region56: #{tpu_custom_call.1} parent=51 // pred_fallthru
          _
      $region52: #{tpu_custom_call.1} parent=5 // pred_fallthru
        _
    $region6: #{tpu_custom_call.1} parent=1 // loop_footer
      %s19 = sadd.s32 1, %s15
    $region7: #{tpu_custom_call.1} parent=1 // loop_footer_branch
      %14 = sbr.rel target = $region3
    $region8: #{tpu_custom_call.1} parent=1 // loop_exit
      _
    %606 = vsyncpa [#allocation3], 1
    %s607 = scalar_lea.sflag [#allocation3], 1
    %608 = vsyncpa %s607, 1

</llo_original>
